<compile_context>
chip_gen: v7x
topology: tpu7x:2x2x1
jax: 0.10.0
libtpu: 0.0.40
codegen_flags: <defaults>
</compile_context>

<pallas_src>
import jax
import jax.numpy as jnp
from jax.experimental import pallas as pl
from jax.experimental.pallas import tpu as pltpu

# -------- synthetic "config" (small, consistent with the module) --------
HIDDEN_SIZE = 32            # config.HIDDEN_SIZE
ATTENTION_HIDDEN_SIZE = 16  # config.ATTENTION_HIDDEN_SIZE
IN_DIM = HIDDEN_SIZE * 3              # 96
MID_DIM = ATTENTION_HIDDEN_SIZE * 2   # 32


def _self_attention_kernel(x_ref, mask_ref, w1t_ref, b1_ref, w2_ref, o_ref):
    # x_ref:    (B_TILE, S, IN_DIM)
    # mask_ref: (B_TILE, S)
    # w1t_ref:  (IN_DIM, MID_DIM)   (pre-transposed in the wrapper)
    # b1_ref:   (1, MID_DIM)
    # w2_ref:   (1, MID_DIM)
    # o_ref:    (B_TILE, S)         lane-dense: softmax axis lives on lanes
    bt, s_len, in_dim = x_ref.shape

    # linear1 + tanh on all B_TILE*S rows at once (collapse leading dims; the
    # last dim is unchanged so this is layout-preserving).
    x2 = x_ref[...].reshape(bt * s_len, in_dim)
    h = jnp.dot(x2, w1t_ref[...], preferred_element_type=jnp.float32)
    h = jnp.tanh(h + b1_ref[...])                        # (bt*S, MID_DIM)

    # linear2 (output width 1): VPU multiply + lane reduction, no MXU round trip.
    # (b2 is intentionally omitted: a constant shift cancels in the softmax.)
    h3 = h.reshape(bt, s_len, h.shape[-1])               # (bt, S, MID_DIM)
    scores = jnp.sum(h3 * w2_ref[...], axis=-1)          # (bt, S)

    # masked_vector: VPU select instead of log(mask + 1e-45)
    scores = jnp.where(mask_ref[...] > 0.0, scores, jnp.float32(-1e30))

    # softmax over the sequence axis (PyTorch dim=1), here the lane axis
    m = jnp.max(scores, axis=-1, keepdims=True)
    e = jnp.exp(scores - m)
    denom = jnp.sum(e, axis=-1, keepdims=True)
    o_ref[...] = (e / denom).astype(o_ref.dtype)


def self_attention(x, mask, w1, b1, w2, b2=None, b_tile=None):
    """x: (B, S, IN_DIM), mask: (B, S). Returns (B, S, 1) f32 (softmax over S)."""
    B, S, in_dim = x.shape
    mid = w1.shape[0]

    # Batch tile: one grid step per b_tile batch rows. Small B -> single step.
    if b_tile is None:
        b_tile = B if B <= 128 else 128
    if b_tile < B and b_tile % 8 != 0:
        b_tile = ((b_tile + 7) // 8) * 8       # keep the (8,128) block rule happy
    n_tiles = pl.cdiv(B, b_tile)
    Bp = n_tiles * b_tile
    if Bp != B:
        # Padding rows have an all-zero mask -> harmless uniform softmax; sliced
        # off below. (VMEM budget: b_tile*S*IN_DIM*4 B double-buffered is tiny
        # even under v7x's 32 MiB scoped default at these feature sizes.)
        x = jnp.pad(x, ((0, Bp - B), (0, 0), (0, 0)))
        mask = jnp.pad(mask, ((0, Bp - B), (0, 0)))

    mask2 = mask.astype(jnp.float32)
    w1t = jnp.asarray(w1, jnp.float32).T               # (IN_DIM, MID_DIM), once in XLA
    b1_2d = b1.reshape(1, mid).astype(jnp.float32)
    w2_2d = w2.reshape(1, mid).astype(jnp.float32)
    # b2 is not passed to the kernel: it cancels exactly in the softmax.

    out2d = pl.pallas_call(
        _self_attention_kernel,
        out_shape=jax.ShapeDtypeStruct((Bp, S), jnp.float32),
        grid_spec=pltpu.PrefetchScalarGridSpec(
            num_scalar_prefetch=0,
            grid=(n_tiles,),
            in_specs=[
                pl.BlockSpec((b_tile, S, in_dim), lambda b: (b, 0, 0)),
                pl.BlockSpec((b_tile, S), lambda b: (b, 0)),
                pl.BlockSpec((in_dim, mid), lambda b: (0, 0)),
                pl.BlockSpec((1, mid), lambda b: (0, 0)),
                pl.BlockSpec((1, mid), lambda b: (0, 0)),
            ],
            out_specs=pl.BlockSpec((b_tile, S), lambda b: (b, 0)),
        ),
        compiler_params=pltpu.CompilerParams(
            dimension_semantics=("parallel",)),   # v7x: shard batch tiles on 2 TCs
    )(x.astype(jnp.float32), mask2, w1t, b1_2d, w2_2d)

    return out2d[:B].reshape(B, S, 1)


def self_attention_ref(x, mask, w1, b1, w2, b2):
    out = jnp.tanh(x @ w1.T + b1)
    out = out @ w2.T + b2
    out = out + jnp.log(mask[..., None] + 1e-45)
    return jax.nn.softmax(out, axis=1)


if __name__ == "__main__":
    key = jax.random.PRNGKey(0)
    kx, km, k1, k2, k3, k4 = jax.random.split(key, 6)

    B, S = 2, 8
    x = jax.random.normal(kx, (B, S, IN_DIM), dtype=jnp.float32)
    # binary mask, guaranteed at least one valid position per row
    mask = (jax.random.uniform(km, (B, S)) > 0.3).astype(jnp.float32)
    mask = mask.at[:, 0].set(1.0)

    # deterministic parameter init (PyTorch Linear layout: weight (out, in))
    w1 = jax.random.normal(k1, (MID_DIM, IN_DIM), dtype=jnp.float32) * 0.05
    b1 = jax.random.normal(k2, (MID_DIM,), dtype=jnp.float32) * 0.05
    w2 = jax.random.normal(k3, (1, MID_DIM), dtype=jnp.float32) * 0.05
    b2 = jax.random.normal(k4, (1,), dtype=jnp.float32) * 0.05

    out = self_attention(x, mask, w1, b1, w2, b2)
    out = jax.block_until_ready(out)

    ref = self_attention_ref(x, mask, w1, b1, w2, b2)
    assert out.shape == (B, S, 1)
    assert jnp.allclose(out, ref, atol=1e-5, rtol=1e-5), "mismatch vs reference"

    print("KERNEL_OK")
</pallas_src>

<mosaic_0001>
module attributes {stable_mosaic.version = 11 : i64} {
  func.func @_self_attention_kernel(%arg0: i32, %arg1: memref<2x8x96xf32, #tpu.memory_space<vmem>>, %arg2: memref<2x8xf32, #tpu.memory_space<vmem>>, %arg3: memref<96x32xf32, #tpu.memory_space<vmem>>, %arg4: memref<1x32xf32, #tpu.memory_space<vmem>>, %arg5: memref<1x32xf32, #tpu.memory_space<vmem>>, %arg6: memref<2x8xf32, #tpu.memory_space<vmem>>) attributes {dimension_semantics = [#tpu.dimension_semantics<parallel>], iteration_bounds = array<i64: 1>, scalar_prefetch = 0 : i64, scratch_operands = 0 : i64, tpu.core_type = #tpu.core_type<tc>, window_params = [{transform_indices = @transform_0, window_bounds = array<i64: 2, 8, 96>}, {transform_indices = @transform_1, window_bounds = array<i64: 2, 8>}, {pipeline_mode = #tpu.pipeline_mode<synchronous>, transform_indices = @transform_2, window_bounds = array<i64: 96, 32>}, {pipeline_mode = #tpu.pipeline_mode<synchronous>, transform_indices = @transform_3, window_bounds = array<i64: 1, 32>}, {pipeline_mode = #tpu.pipeline_mode<synchronous>, transform_indices = @transform_4, window_bounds = array<i64: 1, 32>}, {transform_indices = @transform_5, window_bounds = array<i64: 2, 8>}]} {
    %c0 = arith.constant 0 : index
    %c0_0 = arith.constant 0 : index
    %c0_1 = arith.constant 0 : index
    %0 = vector.load %arg1[%c0, %c0_0, %c0_1] : memref<2x8x96xf32, #tpu.memory_space<vmem>>, vector<2x8x96xf32>
    %1 = vector.shape_cast %0 : vector<2x8x96xf32> to vector<16x96xf32>
    %c0_2 = arith.constant 0 : index
    %c0_3 = arith.constant 0 : index
    %2 = vector.load %arg3[%c0_2, %c0_3] : memref<96x32xf32, #tpu.memory_space<vmem>>, vector<96x32xf32>
    %cst = arith.constant dense<0.000000e+00> : vector<16x32xf32>
    %3 = tpu.matmul %1, %2, %cst {dimension_numbers = #tpu.dot_dimension_numbers<[1], [0], [0], [1], [0, 0, 1, 1], [], []>} : vector<16x96xf32>, vector<96x32xf32>, vector<16x32xf32> -> vector<16x32xf32>
    %c0_4 = arith.constant 0 : index
    %c0_5 = arith.constant 0 : index
    %4 = vector.load %arg4[%c0_4, %c0_5] : memref<1x32xf32, #tpu.memory_space<vmem>>, vector<1x32xf32>
    %5 = vector.broadcast %4 : vector<1x32xf32> to vector<16x32xf32>
    %6 = arith.addf %3, %5 : vector<16x32xf32>
    %7 = math.tanh %6 : vector<16x32xf32>
    %8 = vector.shape_cast %7 : vector<16x32xf32> to vector<2x8x32xf32>
    %c0_6 = arith.constant 0 : index
    %c0_7 = arith.constant 0 : index
    %9 = vector.load %arg5[%c0_6, %c0_7] : memref<1x32xf32, #tpu.memory_space<vmem>>, vector<1x32xf32>
    %10 = vector.shape_cast %9 : vector<1x32xf32> to vector<1x1x32xf32>
    %11 = vector.broadcast %10 : vector<1x1x32xf32> to vector<2x8x32xf32>
    %12 = arith.mulf %8, %11 : vector<2x8x32xf32>
    %cst_8 = arith.constant dense<0.000000e+00> : vector<2x8xf32>
    %13 = vector.multi_reduction <add>, %12, %cst_8 [2] : vector<2x8x32xf32> to vector<2x8xf32>
    %c0_9 = arith.constant 0 : index
    %c0_10 = arith.constant 0 : index
    %14 = vector.load %arg2[%c0_9, %c0_10] : memref<2x8xf32, #tpu.memory_space<vmem>>, vector<2x8xf32>
    %cst_11 = arith.constant 0.000000e+00 : f32
    %15 = vector.broadcast %cst_11 : f32 to vector<2x8xf32>
    %16 = arith.cmpf ogt, %14, %15 : vector<2x8xf32>
    %cst_12 = arith.constant -1.000000e+30 : f32
    %17 = vector.broadcast %cst_12 : f32 to vector<2x8xf32>
    %18 = arith.select %16, %13, %17 : vector<2x8xi1>, vector<2x8xf32>
    %cst_13 = arith.constant dense<0xFF800000> : vector<2xf32>
    %19 = vector.multi_reduction <maximumf>, %18, %cst_13 [1] : vector<2x8xf32> to vector<2xf32>
    %20 = vector.shape_cast %19 : vector<2xf32> to vector<2x1xf32>
    %21 = vector.broadcast %20 : vector<2x1xf32> to vector<2x8xf32>
    %22 = arith.subf %18, %21 : vector<2x8xf32>
    %23 = math.exp %22 : vector<2x8xf32>
    %cst_14 = arith.constant dense<0.000000e+00> : vector<2xf32>
    %24 = vector.multi_reduction <add>, %23, %cst_14 [1] : vector<2x8xf32> to vector<2xf32>
    %25 = vector.shape_cast %24 : vector<2xf32> to vector<2x1xf32>
    %26 = vector.broadcast %25 : vector<2x1xf32> to vector<2x8xf32>
    %27 = arith.divf %23, %26 : vector<2x8xf32>
    %c0_15 = arith.constant 0 : index
    %c0_16 = arith.constant 0 : index
    %28 = vector.load %arg6[%c0_15, %c0_16] : memref<2x8xf32, #tpu.memory_space<vmem>>, vector<2x8xf32>
    tpu.vector_store %arg6[%c0_15, %c0_16], %27 {strides = array<i32>} : memref<2x8xf32, #tpu.memory_space<vmem>>, vector<2x8xf32>,
    return
  }
  func.func @transform_0(%arg0: i32) -> (i32, i32, i32) {
    %c0_i32 = arith.constant 0 : i32
    %c0_i32_0 = arith.constant 0 : i32
    %c0_i32_1 = arith.constant 0 : i32
    return %arg0, %c0_i32, %c0_i32_0 : i32, i32, i32
  }
  func.func @transform_1(%arg0: i32) -> (i32, i32) {
    %c0_i32 = arith.constant 0 : i32
    %c0_i32_0 = arith.constant 0 : i32
    return %arg0, %c0_i32 : i32, i32
  }
  func.func @transform_2(%arg0: i32) -> (i32, i32) {
    %c0_i32 = arith.constant 0 : i32
    %c0_i32_0 = arith.constant 0 : i32
    %c0_i32_1 = arith.constant 0 : i32
    return %c0_i32, %c0_i32_0 : i32, i32
  }
  func.func @transform_3(%arg0: i32) -> (i32, i32) {
    %c0_i32 = arith.constant 0 : i32
    %c0_i32_0 = arith.constant 0 : i32
    %c0_i32_1 = arith.constant 0 : i32
    return %c0_i32, %c0_i32_0 : i32, i32
  }
  func.func @transform_4(%arg0: i32) -> (i32, i32) {
    %c0_i32 = arith.constant 0 : i32
    %c0_i32_0 = arith.constant 0 : i32
    %c0_i32_1 = arith.constant 0 : i32
    return %c0_i32, %c0_i32_0 : i32, i32
  }
  func.func @transform_5(%arg0: i32) -> (i32, i32) {
    %c0_i32 = arith.constant 0 : i32
    %c0_i32_0 = arith.constant 0 : i32
    return %arg0, %c0_i32 : i32, i32
  }
}

</mosaic_0001>

<llo_original>
// kernel: tpu_custom_call.1
$region0: #{tpu_custom_call.1}
  #allocation0 [shape = 'u32[]', space=smem, size = 0x4, offset = 0x4, fixed_abs, tag = 'smem constant byte address 0x4 - core index']
  #allocation1 [shape = 'u32[144,128]{1,0:T(1,128)}', space=vmem, size = 0x12000, scoped, tag = 'internal scratch']
  %s0 = inlined_call_operand.vmem [shape: f32[2,8,96], index: 0, kind: input, shape index: {}]
  %s1 = inlined_call_operand.vmem [shape: f32[2,8], index: 1, kind: input, shape index: {}]
  %s2 = inlined_call_operand.vmem [shape: f32[96,32], index: 2, kind: input, shape index: {}]
  %s3 = inlined_call_operand.vmem [shape: f32[1,32], index: 3, kind: input, shape index: {}]
  %s4 = inlined_call_operand.vmem [shape: f32[1,32], index: 4, kind: input, shape index: {}]
  %s5 = inlined_call_operand.hbm [shape: f32[2,8], index: 5, kind: output, shape index: {}]
  %s6 = sld [smem:[#allocation0]]
  $region30: #{tpu_custom_call.1} parent=0
    _
  %s8 = ssub.s32 1, %s6
  %s9 = scalar_select 0, %s8, %s6
  $region1: #{tpu_custom_call.1} parent=0
    #allocation2 [shape = 'u8[1024]{0}', space=vmem, size = 0x400, scoped, tag = 'output window, operand 0, single buffered']
    #allocation3 [shape = 's32[1]{0}', space=sflag, size = 0x4, scoped, tag = 'scoped memory for tpu_custom_call.1']
    %10 = vsyncpa [#allocation3], 0
    // Predicated region
    $region2: #{tpu_custom_call.1} parent=1 // pred_check
      _
    $region3: #{tpu_custom_call.1} parent=1 // pred_check_branch
      %12 = sbr.rel (0) target = $region5
    $region4: #{tpu_custom_call.1} parent=1 // pred_region
      _
    $region5: #{tpu_custom_call.1} parent=1 // pred_fallthru
      _
    // Predicated region
    $region6: #{tpu_custom_call.1} parent=1 // pred_check
      _
    $region7: #{tpu_custom_call.1} parent=1 // pred_check_branch
      %14 = sbr.rel (0) target = $region9
    $region8: #{tpu_custom_call.1} parent=1 // pred_region
      _
    $region9: #{tpu_custom_call.1} parent=1 // pred_fallthru
      _
    // Predicated region
    $region10: #{tpu_custom_call.1} parent=1 // pred_check
      _
    $region11: #{tpu_custom_call.1} parent=1 // pred_check_branch
      %16 = sbr.rel (0) target = $region13
    $region12: #{tpu_custom_call.1} parent=1 // pred_region
      _
    $region13: #{tpu_custom_call.1} parent=1 // pred_fallthru
      _
    // Predicated region
    $region14: #{tpu_custom_call.1} parent=1 // pred_check
      _
    $region15: #{tpu_custom_call.1} parent=1 // pred_check_branch
      %18 = sbr.rel (0) target = $region17
    $region16: #{tpu_custom_call.1} parent=1 // pred_region
      _
    $region17: #{tpu_custom_call.1} parent=1 // pred_fallthru
      _
    // Predicated region
    $region18: #{tpu_custom_call.1} parent=1 // pred_check
      _
    $region19: #{tpu_custom_call.1} parent=1 // pred_check_branch
      %20 = sbr.rel (0) target = $region21
    $region20: #{tpu_custom_call.1} parent=1 // pred_region
      _
    $region21: #{tpu_custom_call.1} parent=1 // pred_fallthru
      _
    %v21 = vld [vmem:[%s0] sm:$0xff]
    %v22 = vld [vmem:[%s0 + $0x8] sm:$0xff]
    %v23 = vld [vmem:[%s2] sm:$0xff]
    %v24 = vld [vmem:[%s2 + $0x8] sm:$0xff]
    %v25 = vld [vmem:[%s2 + $0x10] sm:$0xff]
    %v26 = vld [vmem:[%s2 + $0x18] sm:$0xff]
    %v27 = vld [vmem:[%s2 + $0x20] sm:$0xff]
    %v28 = vld [vmem:[%s2 + $0x28] sm:$0xff]
    %v29 = vld [vmem:[%s2 + $0x30] sm:$0xff]
    %v30 = vld [vmem:[%s2 + $0x38] sm:$0xff]
    %v31 = vld [vmem:[%s2 + $0x40] sm:$0xff]
    %v32 = vld [vmem:[%s2 + $0x48] sm:$0xff]
    %v33 = vld [vmem:[%s2 + $0x50] sm:$0xff]
    %v34 = vld [vmem:[%s2 + $0x58] sm:$0xff]
    %v35 = vld [vmem:[%s3] sm:$0x1]
    %v37 = vlaneseq
    %v38 = vshrl.u32 %v37, 7
    %v39 = vsub.s32 0, %v38
    %v40 = vrot.slane %v35, %v39
    %vm42 = vcmask 785408
    %v44 = vsel %vm42, %v21, 0
    %v47 = vsel %vm42, %v22, 0
    %49 = vmatprep.subr.mxu0 0.0
    %50 = vmatpush1.msra.mxu0 %v23
    %51 = vmatprep.subr.mxu0 0.0
    %52 = vmatpush1.msra.mxu0 %v24
    %53 = vmatprep.subr.mxu0 0.0
    %54 = vmatpush1.msra.mxu0 %v25
    %55 = vmatprep.subr.mxu0 0.0
    %56 = vmatpush1.msra.mxu0 %v26
    %57 = vmatprep.subr.mxu0 0.0
    %58 = vmatpush1.msra.mxu0 %v27
    %59 = vmatprep.subr.mxu0 0.0
    %60 = vmatpush1.msra.mxu0 %v28
    %61 = vmatprep.subr.mxu0 0.0
    %62 = vmatpush1.msra.mxu0 %v29
    %63 = vmatprep.subr.mxu0 0.0
    %64 = vmatpush1.msra.mxu0 %v30
    %65 = vmatprep.subr.mxu0 0.0
    %66 = vmatpush1.msra.mxu0 %v31
    %67 = vmatprep.subr.mxu0 0.0
    %68 = vmatpush1.msra.mxu0 %v32
    %69 = vmatprep.subr.mxu0 0.0
    %70 = vmatpush1.msra.mxu0 %v33
    %71 = vmatprep.subr.mxu0 0.0
    %72 = vmatpush1.msra.mxu0 %v34
    %73 = vmatprep.subr.mxu0 0.0
    %74 = vmatpush1.msra.mxu0 0.0
    %75 = vmatprep.subr.mxu0 0.0
    %76 = vmatpush1.msra.mxu0 0.0
    %77 = vmatprep.subr.mxu0 0.0
    %78 = vmatpush1.msra.mxu0 0.0
    %79 = vmatprep.subr.mxu0 0.0
    %80 = vmatpush1.msra.mxu0 0.0
    %81 = vmatprep.subr.mxu0 0.0
    %82 = vmatpush1.msra.mxu0 0.0
    %83 = vmatprep.subr.mxu0 0.0
    %84 = vmatpush1.msra.mxu0 0.0
    %85 = vmatprep.subr.mxu0 0.0
    %86 = vmatpush1.msra.mxu0 0.0
    %87 = vmatprep.subr.mxu0 0.0
    %88 = vmatpush1.msra.mxu0 0.0
    %89 = vmatprep.subr.mxu0 0.0
    %90 = vmatpush1.msra.mxu0 0.0
    %91 = vmatprep.subr.mxu0 0.0
    %92 = vmatpush1.msra.mxu0 0.0
    %93 = vmatprep.subr.mxu0 0.0
    %94 = vmatpush1.msra.mxu0 0.0
    %95 = vmatprep.subr.mxu0 0.0
    %96 = vmatpush1.msra.mxu0 0.0
    %97 = vmatprep.subr.mxu0 0.0
    %98 = vmatpush1.msra.mxu0 0.0
    %99 = vmatprep.subr.mxu0 0.0
    %100 = vmatpush1.msra.mxu0 0.0
    %101 = vmatprep.subr.mxu0 0.0
    %102 = vmatpush1.msra.mxu0 0.0
    %103 = vmatprep.subr.mxu0 0.0
    %104 = vmatpush1.msra.mxu0 0.0
    %105 = vmatprep.subr.mxu0 0.0
    %106 = vmatpush1.msra.mxu0 0.0
    %107 = vmatprep.subr.mxu0 0.0
    %108 = vmatpush1.msra.mxu0 0.0
    %109 = vmatprep.subr.mxu0 0.0
    %110 = vmatpush1.msra.mxu0 0.0
    %111 = vmatprep.subr.mxu0 0.0
    %112 = vmatpush1.msra.mxu0 0.0
    %113 = vmatprep.mubr.f32.mxu0 0.0
    %114 = vmatmul.mubr.f32.gmra.mrb[0].mxu0 %v44
    %v115 = vpop.f32.mrb[0].mxu0
    %v116 = vadd.f32 %v40, %v115
    %v117 = vpop.f32.mrb[0].mxu0
    %118 = vmatprep.mubr.f32.mxu0 0.0
    %119 = vmatmul.mubr.f32.gmra.mrb[0].mxu0 %v47
    %v120 = vpop.f32.mrb[0].mxu0
    %v121 = vadd.f32 %v40, %v120
    %v122 = vpop.f32.mrb[0].mxu0
    %123 = vdwg.mxu0
    %v124 = vtanh.pop %v116
    %v125 = vtanh.pop %v121
    %v126 = vld [vmem:[%s4] sm:$0x1]
    %v128 = vlaneseq
    %v129 = vshrl.u32 %v128, 7
    %v130 = vsub.s32 0, %v129
    %v131 = vrot.slane %v126, %v130
    %v133 = vmul.f32 %v124, %v131
    %v134 = vmul.f32 %v125, %v131
    %vm135 = vcmask 261120
    %v136 = vsel %vm135, %v133, 0.0
    %137 = vadd.xlane.f32.xlu0 %v136
    %v138 = vpop.xlane.xlu0 %137
    %v139 = vsel %vm135, %v134, 0.0
    %140 = vadd.xlane.f32.xlu0 %v139
    %v141 = vpop.xlane.xlu0 %140
    %v142 = vld [vmem:[%s1] sm:$0x3]
    %vm143 = vcmp.gt.f32.partialorder %v142, 0.0
    %v146 = vlaneseq
    %v147 = vand.u32 %v146, 127
    %v148 = vlaneseq
    %v149 = vshrl.u32 %v148, 7
    %v150 = vsub.s32 %v147, %v149
    %v151 = vrot.slane %v138, %v150
    %v152 = vlaneseq
    %v153 = vshrl.u32 %v152, 7
    %v154 = vsub.s32 %v147, %v153
    %v155 = vrot.slane %v141, %v154
    %vm156 = vcmask 1041409
    %v157 = vsel %vm156, %v155, %v151
    %v159 = vsel %vm143, %v157, -1e+30
    %vm160 = vcmask 58368
    %v161 = vsel %vm160, %v159, -inf
    %162 = vmax.xlane.f32.xlu0 %v161
    %v163 = vpop.xlane.xlu0 %162
    %v164 = vsub.f32 %v159, %v163
    %v165 = vmul.f32 %v164, 1.442695
    %v166 = vpow.pop %v165
    %v167 = vsel %vm160, %v166, 0.0
    %168 = vadd.xlane.f32.xlu0 %v167
    %v169 = vpop.xlane.xlu0 %168
    %v170 = vrcp.pop %v169
    %v171 = vmul.f32 %v166, %v170
    %172 = vst.msk [vmem:[#allocation2] sm:$0x3] %vm160, %v171
    // Predicated region
    $region22: #{tpu_custom_call.1} parent=1 // pred_check
      _
    $region23: #{tpu_custom_call.1} parent=1 // pred_check_branch
      %174 = sbr.rel (0) target = $region25
    $region24: #{tpu_custom_call.1} parent=1 // pred_region
      %s176 = ssub.s32 32, 32
      %177 = vsyncadd [#allocation3], %s176
      %s179 = sshll.u32 [#allocation2], 4
      %s180 = int_to_ptr.vmem [resolvable:$true] %s179
      %182 = dma.vmem_to_hbm [thread:$0]  %s180, 32, %s5, [#allocation3]
    $region25: #{tpu_custom_call.1} parent=1 // pred_fallthru
      _
    // Predicated region
    $region26: #{tpu_custom_call.1} parent=1 // pred_check
      _
    $region27: #{tpu_custom_call.1} parent=1 // pred_check_branch
      %184 = sbr.rel (0) target = $region29
    $region28: #{tpu_custom_call.1} parent=1 // pred_region
      %185 = dma.done [#allocation3], 32
    $region29: #{tpu_custom_call.1} parent=1 // pred_fallthru
      _
    %186 = vsyncpa [#allocation3], 1

</llo_original>
